<compile_context>
chip_gen: v6e
topology: v6e:2x2x1
jax: 0.10.0
libtpu: 0.0.40
codegen_flags: <defaults>
</compile_context>

<pallas_src>
import jax
import jax.numpy as jnp
from jax.experimental import pallas as pl
from jax.experimental.pallas import tpu as pltpu


def _decode_kernel(tab_ref, pred_ref, out_ref):
    """Decode one [b_tile, lane_tile] block of YOLO head activations.

    tab_ref  : VMEM (3, lane_tile) per-column constants:
               row 0: 1.0 where the channel uses exp (w, h), else 0.0
               row 1: multiplier (stride for x/y, 1 for conf,
                      anchor_w / anchor_h in *pixels* for w / h)
               row 2: additive bias (grid_x*stride / grid_y*stride / 0)
    pred_ref : VMEM (b_tile, lane_tile) raw prediction block (native dtype)
    out_ref  : VMEM (b_tile, lane_tile) decoded output (same dtype/layout)
    """
    p = pred_ref[...].astype(jnp.float32)

    use_exp = tab_ref[0:1, :] > 0.5          # (1, lane_tile) bool
    mult = tab_ref[1:2, :]                   # (1, lane_tile)
    bias = tab_ref[2:3, :]                   # (1, lane_tile)

    # Single exp per element: exp(p) on w/h lanes, exp(-p) on sigmoid lanes.
    q = jnp.where(use_exp, p, -p)
    e = jnp.exp(q)

    # sigmoid(p) = 1 / (1 + exp(-p)).  Clamp the denominator finite so the
    # Newton refinement below never evaluates inf * 0 when exp(-p) overflows
    # (result correctly flushes to ~0, matching the reference sigmoid).
    d = jnp.minimum(1.0 + e, jnp.float32(3.0e38))
    r = pl.reciprocal(d, approx=True)
    r = r * (2.0 - d * r)                    # one Newton step: ~exact, VPU-only

    val = jnp.where(use_exp, e, r)           # select (never multiply) the inf path
    out_ref[...] = (val * mult + bias).astype(out_ref.dtype)


def yolo_decode(prediction, anchors, img_dim=(160, 320)):
    """Pallas equivalent of YOLOLoss.forward(prediction, targets=None).

    prediction: [B, A, H, W, 5] (float32 or bfloat16)
    anchors:    [A, 2] rows are (anchor_h, anchor_w) in image pixels
    returns:    [B, A*H*W, 5] -- decoded (x, y, w, h) in image pixels + conf,
                same dtype as `prediction`
    """
    B, A, H, W, D = prediction.shape
    assert D == 5
    # NOTE: stride derived from img_dim[0]/H and applied to x/y/w/h alike,
    # exactly as in the reference PyTorch module (wrong for non-square
    # img_dim aspect ratios; faithful to the spec).
    stride = float(img_dim[0]) / H
    L = H * W * D                              # one (b, a) slab, lane-contiguous
    AL = A * L                                 # full lane/column extent per batch

    pred2d = prediction.reshape(B, AL)         # free (contiguous), native dtype
    in_dtype = pred2d.dtype
    itemsize = jnp.dtype(in_dtype).itemsize

    # ---- per-column constant table (3, A*L), computed once in the wrapper ---
    col = jnp.arange(AL, dtype=jnp.int32)
    a_idx = col // L                           # anchor index of this column
    r = col % L
    ch = r % D                                 # 0:x 1:y 2:w 3:h 4:conf
    pos = r // D                               # spatial index h*W + w
    gx = (pos % W).astype(jnp.float32)
    gy = (pos // W).astype(jnp.float32)
    is_x, is_y = ch == 0, ch == 1
    is_w, is_h = ch == 2, ch == 3
    is_c = ch == 4

    anchors_f = anchors.astype(jnp.float32)    # (A, 2) = (anchor_h, anchor_w) px
    a_h_col = anchors_f[a_idx, 0]              # (AL,)
    a_w_col = anchors_f[a_idx, 1]

    use_exp = (is_w | is_h).astype(jnp.float32)
    # exp(w) * (anchor_w/stride) * stride == exp(w) * anchor_w  (pixels)
    mult = (jnp.where(is_x | is_y, stride, 0.0)
            + jnp.where(is_c, 1.0, 0.0)
            + jnp.where(is_w, a_w_col, 0.0)
            + jnp.where(is_h, a_h_col, 0.0))
    bias = jnp.where(is_x, gx * stride, 0.0) + jnp.where(is_y, gy * stride, 0.0)
    col_tab = jnp.stack([use_exp, mult, bias], axis=0)   # (3, AL) float32

    # ---- block sizing -------------------------------------------------------
    target_block_bytes = 2 * 1024 * 1024       # near the tile-size knee, fits
                                               # comfortably in v7x's 64 MiB
    # Sublane (batch) tiling: full B, or a multiple of 8.
    if B <= 8 or B * AL * itemsize <= target_block_bytes:
        b_tile = B
    else:
        b_tile = max(8, min(B, ((target_block_bytes // (AL * itemsize)) // 8) * 8))
    n_b = pl.cdiv(B, b_tile)

    # Lane tiling: multiples of 128 (or full AL); ensure >= 2 total grid steps
    # when possible so v7x's two TensorCores both get work.
    lane_cap = max(128, ((target_block_bytes // max(1, b_tile * itemsize)) // 128) * 128)
    lane_tile = min(AL, lane_cap)
    if n_b == 1 and AL >= 256 and lane_tile >= AL:
        lane_tile = ((pl.cdiv(AL, 2) + 127) // 128) * 128
    n_l = pl.cdiv(AL, lane_tile)

    # ---- explicit VMEM budget (double-buffered in/out blocks + table) -------
    io_block_bytes = b_tile * lane_tile * (itemsize + itemsize)   # in + out
    tab_block_bytes = 3 * lane_tile * 4
    vmem_need = 2 * (io_block_bytes + tab_block_bytes)
    vmem_limit = int(min(64 * 1024 * 1024,
                         max(16 * 1024 * 1024, 2 * vmem_need + (1 << 20))))

    out = pl.pallas_call(
        _decode_kernel,
        out_shape=jax.ShapeDtypeStruct((B, AL), in_dtype),
        grid_spec=pltpu.PrefetchScalarGridSpec(
            num_scalar_prefetch=0,
            grid=(n_b, n_l),
            in_specs=[
                pl.BlockSpec((3, lane_tile), lambda i, j: (0, j)),       # constants
                pl.BlockSpec((b_tile, lane_tile), lambda i, j: (i, j)),  # predictions
            ],
            out_specs=pl.BlockSpec((b_tile, lane_tile), lambda i, j: (i, j)),
        ),
        compiler_params=pltpu.CompilerParams(
            dimension_semantics=("parallel", "parallel"),
            vmem_limit_bytes=vmem_limit,
        ),
    )(col_tab, pred2d)

    # [B, A*H*W*5] -> [B, A*H*W, 5]: free reshape, identical memory layout.
    return out.reshape(B, A * H * W, D)


def yolo_decode_ref(prediction, anchors, img_dim=(160, 320)):
    """Plain-JAX reference mirroring the PyTorch forward (targets=None)."""
    B, A, H, W, _ = prediction.shape
    stride = img_dim[0] / H
    pred = prediction.astype(jnp.float32)
    x = jax.nn.sigmoid(pred[..., 0])
    y = jax.nn.sigmoid(pred[..., 1])
    w = pred[..., 2]
    h = pred[..., 3]
    conf = jax.nn.sigmoid(pred[..., 4])
    grid_x = jnp.tile(jnp.arange(W, dtype=jnp.float32), (H, 1)).reshape(1, 1, H, W)
    grid_y = jnp.tile(jnp.arange(H, dtype=jnp.float32), (W, 1)).T.reshape(1, 1, H, W)
    scaled = anchors.astype(jnp.float32) / stride
    anchor_h = scaled[:, 0].reshape(1, A, 1, 1)
    anchor_w = scaled[:, 1].reshape(1, A, 1, 1)
    pred_bboxes = jnp.stack(
        [x + grid_x, y + grid_y, jnp.exp(w) * anchor_w, jnp.exp(h) * anchor_h],
        axis=-1,
    ) * stride
    return jnp.concatenate(
        [pred_bboxes.reshape(B, -1, 4), conf.reshape(B, -1, 1)], axis=-1
    )


if __name__ == "__main__":
    key = jax.random.PRNGKey(0)
    B, A, H, W, D = 2, 3, 16, 16, 5
    img_dim = (160, 320)

    # deterministic synthetic anchors (anchor_h, anchor_w) in image pixels
    anchors = jnp.array(
        [[10.0, 13.0], [16.0, 30.0], [33.0, 23.0]], dtype=jnp.float32
    )
    prediction = jax.random.normal(key, (B, A, H, W, D), dtype=jnp.float32)

    out = yolo_decode(prediction, anchors, img_dim)
    out = jax.block_until_ready(out)

    ref = yolo_decode_ref(prediction, anchors, img_dim)
    assert out.shape == (B, A * H * W, D)
    assert jnp.allclose(out.astype(jnp.float32), ref, atol=1e-4, rtol=1e-4), \
        "mismatch vs reference"

    print("KERNEL_OK")
</pallas_src>

<mosaic_0001>
module attributes {stable_mosaic.version = 11 : i64} {
  func.func @_decode_kernel(%arg0: i32, %arg1: i32, %arg2: memref<3x1920xf32, #tpu.memory_space<vmem>>, %arg3: memref<2x1920xf32, #tpu.memory_space<vmem>>, %arg4: memref<2x1920xf32, #tpu.memory_space<vmem>>) attributes {dimension_semantics = [#tpu.dimension_semantics<parallel>, #tpu.dimension_semantics<parallel>], iteration_bounds = array<i64: 1, 2>, scalar_prefetch = 0 : i64, scratch_operands = 0 : i64, tpu.core_type = #tpu.core_type<tc>, window_params = [{transform_indices = @transform_0, window_bounds = array<i64: 3, 1920>}, {transform_indices = @transform_1, window_bounds = array<i64: 2, 1920>}, {transform_indices = @transform_2, window_bounds = array<i64: 2, 1920>}]} {
    %c0 = arith.constant 0 : index
    %c0_0 = arith.constant 0 : index
    %0 = vector.load %arg3[%c0, %c0_0] : memref<2x1920xf32, #tpu.memory_space<vmem>>, vector<2x1920xf32>
    %c0_1 = arith.constant 0 : index
    %c0_2 = arith.constant 0 : index
    %1 = vector.load %arg2[%c0_1, %c0_2] : memref<3x1920xf32, #tpu.memory_space<vmem>>, vector<1x1920xf32>
    %cst = arith.constant 5.000000e-01 : f32
    %2 = vector.broadcast %cst : f32 to vector<1x1920xf32>
    %3 = arith.cmpf ogt, %1, %2 : vector<1x1920xf32>
    %c1 = arith.constant 1 : index
    %c0_3 = arith.constant 0 : index
    %4 = vector.load %arg2[%c1, %c0_3] : memref<3x1920xf32, #tpu.memory_space<vmem>>, vector<1x1920xf32>
    %c2 = arith.constant 2 : index
    %c0_4 = arith.constant 0 : index
    %5 = vector.load %arg2[%c2, %c0_4] : memref<3x1920xf32, #tpu.memory_space<vmem>>, vector<1x1920xf32>
    %cst_5 = arith.constant 0.000000e+00 : f32
    %6 = vector.broadcast %cst_5 : f32 to vector<2x1920xf32>
    %7 = arith.subf %6, %0 : vector<2x1920xf32>
    %8 = vector.shape_cast %3 : vector<1x1920xi1> to vector<1x1920xi1>
    %9 = vector.broadcast %8 : vector<1x1920xi1> to vector<2x1920xi1>
    %10 = arith.select %9, %0, %7 : vector<2x1920xi1>, vector<2x1920xf32>
    %11 = math.exp %10 : vector<2x1920xf32>
    %cst_6 = arith.constant 1.000000e+00 : f32
    %12 = vector.broadcast %cst_6 : f32 to vector<2x1920xf32>
    %13 = arith.addf %12, %11 : vector<2x1920xf32>
    %cst_7 = arith.constant 3.000000e+38 : f32
    %14 = vector.broadcast %cst_7 : f32 to vector<2x1920xf32>
    %15 = arith.minimumf %13, %14 : vector<2x1920xf32>
    %16 = tpu.reciprocal %15 {approx = true} : vector<2x1920xf32> -> vector<2x1920xf32>
    %17 = arith.mulf %15, %16 : vector<2x1920xf32>
    %cst_8 = arith.constant 2.000000e+00 : f32
    %18 = vector.broadcast %cst_8 : f32 to vector<2x1920xf32>
    %19 = arith.subf %18, %17 : vector<2x1920xf32>
    %20 = arith.mulf %16, %19 : vector<2x1920xf32>
    %21 = vector.shape_cast %3 : vector<1x1920xi1> to vector<1x1920xi1>
    %22 = vector.broadcast %21 : vector<1x1920xi1> to vector<2x1920xi1>
    %23 = arith.select %22, %11, %20 : vector<2x1920xi1>, vector<2x1920xf32>
    %24 = vector.broadcast %4 : vector<1x1920xf32> to vector<2x1920xf32>
    %25 = arith.mulf %23, %24 : vector<2x1920xf32>
    %26 = vector.broadcast %5 : vector<1x1920xf32> to vector<2x1920xf32>
    %27 = arith.addf %25, %26 : vector<2x1920xf32>
    %c0_9 = arith.constant 0 : index
    %c0_10 = arith.constant 0 : index
    %28 = vector.load %arg4[%c0_9, %c0_10] : memref<2x1920xf32, #tpu.memory_space<vmem>>, vector<2x1920xf32>
    tpu.vector_store %arg4[%c0_9, %c0_10], %27 {strides = array<i32>} : memref<2x1920xf32, #tpu.memory_space<vmem>>, vector<2x1920xf32>,
    return
  }
  func.func @transform_0(%arg0: i32, %arg1: i32) -> (i32, i32) {
    %c0_i32 = arith.constant 0 : i32
    %c0_i32_0 = arith.constant 0 : i32
    return %c0_i32, %arg1 : i32, i32
  }
  func.func @transform_1(%arg0: i32, %arg1: i32) -> (i32, i32) {
    %c0_i32 = arith.constant 0 : i32
    return %arg0, %arg1 : i32, i32
  }
  func.func @transform_2(%arg0: i32, %arg1: i32) -> (i32, i32) {
    %c0_i32 = arith.constant 0 : i32
    return %arg0, %arg1 : i32, i32
  }
}

</mosaic_0001>

<llo_original>
// kernel: tpu_custom_call.1
$region0: #{tpu_custom_call.1}
  #allocation0 [shape = 'u32[]', space=smem, size = 0x4, offset = 0x4, fixed_abs, tag = 'smem constant byte address 0x4 - core index']
  #allocation1 [shape = 'u32[144,128]{1,0:T(1,128)}', space=vmem, size = 0x12000, scoped, tag = 'internal scratch']
  %s0 = inlined_call_operand.hbm [shape: f32[3,3840], index: 0, kind: input, shape index: {}]
  %s1 = inlined_call_operand.hbm [shape: f32[2,3840], index: 1, kind: input, shape index: {}]
  %s2 = inlined_call_operand.hbm [shape: f32[2,3840], index: 2, kind: output, shape index: {}]
  %s3 = sld [smem:[#allocation0]]
  $region49: #{tpu_custom_call.1} parent=0
    _
  %s5 = ssub.s32 1, %s3
  %s6 = scalar_select 0, %s5, %s3
  $region1: #{tpu_custom_call.1} parent=0
    #allocation2 [shape = 'u8[61440]{0}', space=vmem, size = 0xf000, scoped, tag = 'input window, operand 0']
    #allocation3 [shape = 's32[2]{0}', space=sflag, size = 0x8, scoped, tag = 'scoped memory for tpu_custom_call.1']
    #allocation4 [shape = 's32[2]{0}', space=sflag, size = 0x8, scoped, tag = 'scoped memory for tpu_custom_call.1']
    #allocation5 [shape = 'u8[30720]{0}', space=vmem, size = 0x7800, scoped, tag = 'input window, operand 1']
    #allocation6 [shape = 's32[2]{0}', space=sflag, size = 0x8, scoped, tag = 'scoped memory for tpu_custom_call.1']
    #allocation7 [shape = 'u8[30720]{0}', space=vmem, size = 0x7800, scoped, tag = 'output window, operand 0']
    %7 = vsyncpa [#allocation3], 0
    %s8 = scalar_lea.sflag [#allocation3], 1
    %9 = vsyncpa %s8, 0
    %10 = vsyncpa [#allocation6], 0
    %s11 = scalar_lea.sflag [#allocation6], 1
    %12 = vsyncpa %s11, 0
    %13 = vsyncpa [#allocation4], 0
    %s14 = scalar_lea.sflag [#allocation4], 1
    %15 = vsyncpa %s14, 0
    loop: start=0, step=1, limit=4
    $region2: #{tpu_custom_call.1} parent=1 // loop_pre_header
      _
    $region3: #{tpu_custom_call.1} parent=1 // loop_header
      %s17 = sphi 0, %s21
      %p18 = scmp.ge.s32.totalorder %s17, 4
      %s24 = sphi 0, %s36
      %s25 = sphi 0, %s32
      %s26 = sphi 0, %s24
      %s27 = sphi 0, %s25
      %s28 = sphi 0, %s26
      %s29 = sphi 0, %s27
      %s39 = sphi 0, %s41
      %s42 = sphi 0, %s39
      %s43 = sphi 0, %s42
      %s59 = sphi 0, %s43
      %s67 = sphi 0, %s69
      %s70 = sphi 0, %s67
      %s71 = sphi 0, %s70
      %s87 = sphi 0, %s71
      %s95 = sphi 0, %s97
      %s98 = sphi 0, %s95
      %s99 = sphi 0, %s98
      %s115 = sphi 0, %s99
    $region4: #{tpu_custom_call.1} parent=1 // loop_header_branch
      %20 = sbr.rel (%p18) target = $region8
    $region5: #{tpu_custom_call.1} parent=1 // loop_body
      %s22 = ssub.s32 %s17, 1
      %s23 = ssub.s32 %s17, 2
      %s30 = sadd.s32 1, %s25
      %p31 = scmp.ge.s32.totalorder %s30, 2
      %s32 = scalar_select %p31, 0, %s30
      %s33 = sadd.s32 1, %s24
      %s34 = scalar_select %p31, %s33, %s24
      %p35 = scmp.ge.s32.totalorder %s34, 1
      %s36 = scalar_select %p35, 0, %s34
      %s37 = ssub.s32 %s25, %s32
      %p38 = scmp.eq.s32.totalorder %s37, 0
      %s40 = sadd.s32 %s39, 1
      %s41 = scalar_select %p38, %s39, %s40
      %p44 = pneg %p38
      %p45 = scmp.eq.s32.totalorder %s17, 1
      %p46 = por %p44, %p45
      %p47 = scmp.ne.s32.totalorder %s39, %s42
      %p48 = scmp.eq.s32.totalorder %s17, 0
      %p49 = por %p47, %p48
      %p50 = scmp.ne.s32.totalorder %s39, %s42
      %p51 = scmp.eq.s32.totalorder %s22, 1
      %p52 = por %p50, %p51
      %p53 = scmp.ne.s32.totalorder %s42, %s43
      %p54 = scmp.eq.s32.totalorder %s22, 0
      %p55 = por %p53, %p54
      %p56 = scmp.ne.s32.totalorder %s42, %s43
      %p57 = scmp.eq.s32.totalorder %s23, 1
      %p58 = por %p56, %p57
      %p60 = scmp.ne.s32.totalorder %s43, %s59
      %p61 = scmp.eq.s32.totalorder %s23, 0
      %p62 = por %p60, %p61
      %s63 = ssub.s32 %s24, %s36
      %s64 = ssub.s32 %s25, %s32
      %s65 = sor.u32 %s63, %s64
      %p66 = scmp.eq.s32.totalorder %s65, 0
      %s68 = sadd.s32 %s67, 1
      %s69 = scalar_select %p66, %s67, %s68
      %p72 = pneg %p66
      %p73 = scmp.eq.s32.totalorder %s17, 1
      %p74 = por %p72, %p73
      %p75 = scmp.ne.s32.totalorder %s67, %s70
      %p76 = scmp.eq.s32.totalorder %s17, 0
      %p77 = por %p75, %p76
      %p78 = scmp.ne.s32.totalorder %s67, %s70
      %p79 = scmp.eq.s32.totalorder %s22, 1
      %p80 = por %p78, %p79
      %p81 = scmp.ne.s32.totalorder %s70, %s71
      %p82 = scmp.eq.s32.totalorder %s22, 0
      %p83 = por %p81, %p82
      %p84 = scmp.ne.s32.totalorder %s70, %s71
      %p85 = scmp.eq.s32.totalorder %s23, 1
      %p86 = por %p84, %p85
      %p88 = scmp.ne.s32.totalorder %s71, %s87
      %p89 = scmp.eq.s32.totalorder %s23, 0
      %p90 = por %p88, %p89
      %s91 = ssub.s32 %s24, %s36
      %s92 = ssub.s32 %s25, %s32
      %s93 = sor.u32 %s91, %s92
      %p94 = scmp.eq.s32.totalorder %s93, 0
      %s96 = sadd.s32 %s95, 1
      %s97 = scalar_select %p94, %s95, %s96
      %p100 = pneg %p94
      %p101 = scmp.eq.s32.totalorder %s17, 1
      %p102 = por %p100, %p101
      %p103 = scmp.ne.s32.totalorder %s95, %s98
      %p104 = scmp.eq.s32.totalorder %s17, 0
      %p105 = por %p103, %p104
      %p106 = scmp.ne.s32.totalorder %s95, %s98
      %p107 = scmp.eq.s32.totalorder %s22, 1
      %p108 = por %p106, %p107
      %p109 = scmp.ne.s32.totalorder %s98, %s99
      %p110 = scmp.eq.s32.totalorder %s22, 0
      %p111 = por %p109, %p110
      %p112 = scmp.ne.s32.totalorder %s98, %s99
      %p113 = scmp.eq.s32.totalorder %s23, 1
      %p114 = por %p112, %p113
      %p116 = scmp.ne.s32.totalorder %s99, %s115
      %p117 = scmp.eq.s32.totalorder %s23, 0
      %p118 = por %p116, %p117
      %p119 = scmp.le.s32.totalorder 1, %s17
      %p120 = scmp.lt.s32.totalorder %s17, 3
      %p121 = pnand %p119, %p120
      %p122 = pneg %p121
      // Predicated region
      $region9: #{tpu_custom_call.1} parent=5 // pred_check
        _
      $region10: #{tpu_custom_call.1} parent=5 // pred_check_branch
        %124 = sbr.rel (%p121) target = $region12
      $region11: #{tpu_custom_call.1} parent=5 // pred_region
        %s125 = ssub.s32 %s17, 1
      $region12: #{tpu_custom_call.1} parent=5 // pred_fallthru
        _
      %p126 = scmp.lt.s32.totalorder %s17, 2
      // Predicated region
      $region13: #{tpu_custom_call.1} parent=5 // pred_check
        %p127 = pneg %p126
      $region14: #{tpu_custom_call.1} parent=5 // pred_check_branch
        %129 = sbr.rel (%p127) target = $region16
      $region15: #{tpu_custom_call.1} parent=5 // pred_region
        // Predicated region
        $region17: #{tpu_custom_call.1} parent=15 // pred_check
          %p130 = pneg %p49
        $region18: #{tpu_custom_call.1} parent=15 // pred_check_branch
          %132 = sbr.rel (%p130) target = $region20
        $region19: #{tpu_custom_call.1} parent=15 // pred_region
          %s133 = sand.u32 %s39, 1
          %s134 = scalar_lea.sflag [#allocation3], %s133
          %s135 = sand.u32 %s39, 1
          %s136 = smul.addr %s135, 60
          %s137 = scalar_lea.vmem [#allocation2], %s136
          %s138 = smul.u32 15, %s25
          %s140 = ssub.s32 960, 960
          %141 = vsyncadd %s134, %s140
          %s142 = smul.addr %s138, 64
          %s143 = scalar_lea.hbm %s0, %s142
          %s145 = sshll.u32 %s137, 4
          %s146 = int_to_ptr.vmem [resolvable:$true] %s145
          %148 = dma.hbm_to_vmem [thread:$0]  %s143, 960, %s146, %s134
        $region20: #{tpu_custom_call.1} parent=15 // pred_fallthru
          _
        // Predicated region
        $region21: #{tpu_custom_call.1} parent=15 // pred_check
          %p149 = pneg %p77
        $region22: #{tpu_custom_call.1} parent=15 // pred_check_branch
          %151 = sbr.rel (%p149) target = $region24
        $region23: #{tpu_custom_call.1} parent=15 // pred_region
          %s152 = sand.u32 %s67, 1
          %s153 = scalar_lea.sflag [#allocation6], %s152
          %s154 = sand.u32 %s67, 1
          %s155 = smul.addr %s154, 30
          %s156 = scalar_lea.vmem [#allocation5], %s155
          %s157 = smul.u32 15, %s25
          %s159 = ssub.s32 480, 480
          %160 = vsyncadd %s153, %s159
          %s161 = smul.addr %s24, 30
          %s162 = sadd.s32 %s157, %s161
          %s163 = smul.addr %s162, 32
          %s164 = scalar_lea.hbm %s1, %s163
          %s166 = sshll.u32 %s156, 4
          %s167 = int_to_ptr.vmem [resolvable:$true] %s166
          %169 = dma.hbm_to_vmem [thread:$0]  %s164, 480, %s167, %s153
        $region24: #{tpu_custom_call.1} parent=15 // pred_fallthru
          _
      $region16: #{tpu_custom_call.1} parent=5 // pred_fallthru
        _
      %p170 = scmp.le.s32.totalorder 1, %s17
      %p171 = scmp.lt.s32.totalorder %s17, 3
      %p172 = pnand %p170, %p171
      %p173 = pneg %p172
      // Predicated region
      $region25: #{tpu_custom_call.1} parent=5 // pred_check
        _
      $region26: #{tpu_custom_call.1} parent=5 // pred_check_branch
        %175 = sbr.rel (%p172) target = $region28
      $region27: #{tpu_custom_call.1} parent=5 // pred_region
        %s176 = ssub.s32 %s17, 1
        %s177 = sand.u32 %s42, 1
        %s178 = scalar_lea.sflag [#allocation3], %s177
        %s179 = sand.u32 %s42, 1
        %s180 = smul.addr %s179, 60
        %s181 = scalar_lea.vmem [#allocation2], %s180
        // Predicated region
        $region29: #{tpu_custom_call.1} parent=27 // pred_check
          %p182 = pneg %p55
        $region30: #{tpu_custom_call.1} parent=27 // pred_check_branch
          %184 = sbr.rel (%p182) target = $region32
        $region31: #{tpu_custom_call.1} parent=27 // pred_region
          %185 = dma.done %s178, 960
        $region32: #{tpu_custom_call.1} parent=27 // pred_fallthru
          _
        %s186 = sand.u32 %s70, 1
        %s187 = scalar_lea.sflag [#allocation6], %s186
        %s188 = sand.u32 %s70, 1
        %s189 = smul.addr %s188, 30
        %s190 = scalar_lea.vmem [#allocation5], %s189
        // Predicated region
        $region33: #{tpu_custom_call.1} parent=27 // pred_check
          %p191 = pneg %p83
        $region34: #{tpu_custom_call.1} parent=27 // pred_check_branch
          %193 = sbr.rel (%p191) target = $region36
        $region35: #{tpu_custom_call.1} parent=27 // pred_region
          %194 = dma.done %s187, 480
        $region36: #{tpu_custom_call.1} parent=27 // pred_fallthru
          _
        %s195 = sand.u32 %s42, 1
        %s196 = scalar_lea.sflag [#allocation3], %s195
        %s197 = sand.u32 %s42, 1
        %s198 = smul.addr %s197, 60
        %s199 = scalar_lea.vmem [#allocation2], %s198
        %p200 = pneg %p55
        %p201 = pneg %p52
        %s202 = sand.u32 %s70, 1
        %s203 = scalar_lea.sflag [#allocation6], %s202
        %s204 = sand.u32 %s70, 1
        %s205 = smul.addr %s204, 30
        %s206 = scalar_lea.vmem [#allocation5], %s205
        %p207 = pneg %p83
        %p208 = pneg %p80
        %p209 = pneg %p111
        %p210 = pneg %p108
        %s211 = sand.u32 %s98, 1
        %s212 = scalar_lea.sflag [#allocation4], %s211
        %s213 = sand.u32 %s98, 1
        %s214 = smul.addr %s213, 30
        %s215 = scalar_lea.vmem [#allocation7], %s214
        %s216 = smul.u32 15, %s27
        %s217 = smul.u32 15, %s27
        %s218 = smul.u32 15, %s27
        %v219 = vld [vmem:[%s190] sm:$0xff]
        %v220 = vld [vmem:[%s190 + $0x8] sm:$0xff]
        %v221 = vld [vmem:[%s190 + $0x10] sm:$0xff]
        %v222 = vld [vmem:[%s190 + $0x18] sm:$0x3f]
        %v223 = vld [vmem:[%s181] ss:$4 sm:$0xff]
        %s224 = scalar_lea.vmem %s181, 32 [#allocation2]
        %v225 = vld [vmem:[%s224] ss:$4 sm:$0xff]
        %vm226 = vcmp.gt.f32.partialorder %v223, 0.5
        %vm227 = vcmp.gt.f32.partialorder %v225, 0.5
        %s228 = scalar_lea.vmem %s181, 1 [#allocation2]
        %v229 = vld [vmem:[%s228] ss:$4 sm:$0xff]
        %s230 = scalar_lea.vmem %s181, 33 [#allocation2]
        %v231 = vld [vmem:[%s230] ss:$4 sm:$0xff]
        %s232 = scalar_lea.vmem %s181, 2 [#allocation2]
        %v233 = vld [vmem:[%s232] ss:$4 sm:$0xff]
        %s234 = scalar_lea.vmem %s181, 34 [#allocation2]
        %v235 = vld [vmem:[%s234] ss:$4 sm:$0xff]
        %v236 = vsub.f32 0.0, %v219
        %v237 = vsub.f32 0.0, %v220
        %v238 = vsub.f32 0.0, %v221
        %v239 = vsub.f32 0.0, %v222
        %v240 = vsel %vm226, 1, 0
        %v241 = vsel %vm227, 1, 0
        %v242 = vlaneseq
        %v243 = vshrl.u32 %v242, 7
        %v244 = vsub.s32 0, %v243
        %v245 = vrot.slane %v240, %v244
        %v246 = vlaneseq
        %v247 = vshrl.u32 %v246, 7
        %v248 = vsub.s32 1, %v247
        %v249 = vrot.slane %v240, %v248
        %v250 = vlaneseq
        %v251 = vshrl.u32 %v250, 7
        %v252 = vsub.s32 2, %v251
        %v253 = vrot.slane %v240, %v252
        %v254 = vlaneseq
        %v255 = vshrl.u32 %v254, 7
        %v256 = vsub.s32 3, %v255
        %v257 = vrot.slane %v240, %v256
        %v258 = vlaneseq
        %v259 = vshrl.u32 %v258, 7
        %v260 = vsub.s32 4, %v259
        %v261 = vrot.slane %v240, %v260
        %v262 = vlaneseq
        %v263 = vshrl.u32 %v262, 7
        %v264 = vsub.s32 5, %v263
        %v265 = vrot.slane %v240, %v264
        %v266 = vlaneseq
        %v267 = vshrl.u32 %v266, 7
        %v268 = vsub.s32 6, %v267
        %v269 = vrot.slane %v240, %v268
        %v270 = vlaneseq
        %v271 = vshrl.u32 %v270, 7
        %v272 = vsub.s32 7, %v271
        %v273 = vrot.slane %v240, %v272
        %v274 = vlaneseq
        %v275 = vshrl.u32 %v274, 7
        %v276 = vsub.s32 0, %v275
        %v277 = vrot.slane %v241, %v276
        %v278 = vlaneseq
        %v279 = vshrl.u32 %v278, 7
        %v280 = vsub.s32 1, %v279
        %v281 = vrot.slane %v241, %v280
        %v282 = vlaneseq
        %v283 = vshrl.u32 %v282, 7
        %v284 = vsub.s32 2, %v283
        %v285 = vrot.slane %v241, %v284
        %v286 = vlaneseq
        %v287 = vshrl.u32 %v286, 7
        %v288 = vsub.s32 3, %v287
        %v289 = vrot.slane %v241, %v288
        %v290 = vlaneseq
        %v291 = vshrl.u32 %v290, 7
        %v292 = vsub.s32 4, %v291
        %v293 = vrot.slane %v241, %v292
        %v294 = vlaneseq
        %v295 = vshrl.u32 %v294, 7
        %v296 = vsub.s32 5, %v295
        %v297 = vrot.slane %v241, %v296
        %v298 = vlaneseq
        %v299 = vshrl.u32 %v298, 7
        %v300 = vsub.s32 6, %v299
        %v301 = vrot.slane %v241, %v300
        %vm302 = vcmp.eq.s32.totalorder %v245, 1
        %vm303 = vcmp.eq.s32.totalorder %v249, 1
        %vm304 = vcmp.eq.s32.totalorder %v253, 1
        %vm305 = vcmp.eq.s32.totalorder %v257, 1
        %vm306 = vcmp.eq.s32.totalorder %v261, 1
        %vm307 = vcmp.eq.s32.totalorder %v265, 1
        %vm308 = vcmp.eq.s32.totalorder %v269, 1
        %vm309 = vcmp.eq.s32.totalorder %v273, 1
        %vm310 = vcmp.eq.s32.totalorder %v277, 1
        %vm311 = vcmp.eq.s32.totalorder %v281, 1
        %vm312 = vcmp.eq.s32.totalorder %v285, 1
        %vm313 = vcmp.eq.s32.totalorder %v289, 1
        %vm314 = vcmp.eq.s32.totalorder %v293, 1
        %vm315 = vcmp.eq.s32.totalorder %v297, 1
        %vm316 = vcmp.eq.s32.totalorder %v301, 1
        %v321 = vcombine.high %v219, %v219
        %v323 = vunpack.c.l.s4 1983009808
        %v324 = vunpack.c.0.s8 %v323
        %v325 = vlaneseq
        %v326 = vshrl.u32 %v325, 7
        %v327 = vsub.s32 %v324, %v326
        %v328 = vrot.slane %v219, %v327
        %v330 = vunpack.c.l.s4 1983009808
        %v331 = vunpack.c.0.s8 %v330
        %v332 = vlaneseq
        %v333 = vshrl.u32 %v332, 7
        %v334 = vsub.s32 %v331, %v333
        %v335 = vrot.slane %v321, %v334
        %v336 = vcombine.high %v328, %v328
        %v337 = vcombine.high %v335, %v335
        %v338 = vcombine.high %v220, %v220
        %v340 = vunpack.c.l.s4 1983009808
        %v341 = vunpack.c.0.s8 %v340
        %v342 = vlaneseq
        %v343 = vshrl.u32 %v342, 7
        %v344 = vsub.s32 %v341, %v343
        %v345 = vrot.slane %v220, %v344
        %v347 = vunpack.c.l.s4 1983009808
        %v348 = vunpack.c.0.s8 %v347
        %v349 = vlaneseq
        %v350 = vshrl.u32 %v349, 7
        %v351 = vsub.s32 %v348, %v350
        %v352 = vrot.slane %v338, %v351
        %v353 = vcombine.high %v345, %v345
        %v354 = vcombine.high %v352, %v352
        %v355 = vcombine.high %v221, %v221
        %v357 = vunpack.c.l.s4 1983009808
        %v358 = vunpack.c.0.s8 %v357
        %v359 = vlaneseq
        %v360 = vshrl.u32 %v359, 7
        %v361 = vsub.s32 %v358, %v360
        %v362 = vrot.slane %v221, %v361
        %v364 = vunpack.c.l.s4 1983009808
        %v365 = vunpack.c.0.s8 %v364
        %v366 = vlaneseq
        %v367 = vshrl.u32 %v366, 7
        %v368 = vsub.s32 %v365, %v367
        %v369 = vrot.slane %v355, %v368
        %v370 = vcombine.high %v362, %v362
        %v371 = vcombine.high %v369, %v369
        %v372 = vcombine.high %v222, %v222
        %v374 = vunpack.c.l.s4 1983009808
        %v375 = vunpack.c.0.s8 %v374
        %v376 = vlaneseq
        %v377 = vshrl.u32 %v376, 7
        %v378 = vsub.s32 %v375, %v377
        %v379 = vrot.slane %v222, %v378
        %v381 = vunpack.c.l.s4 1983009808
        %v382 = vunpack.c.0.s8 %v381
        %v383 = vlaneseq
        %v384 = vshrl.u32 %v383, 7
        %v385 = vsub.s32 %v382, %v384
        %v386 = vrot.slane %v372, %v385
        %v387 = vcombine.high %v379, %v379
        %v407 = vcombine.high %v236, %v236
        %v409 = vunpack.c.l.s4 1983009808
        %v410 = vunpack.c.0.s8 %v409
        %v411 = vlaneseq
        %v412 = vshrl.u32 %v411, 7
        %v413 = vsub.s32 %v410, %v412
        %v414 = vrot.slane %v236, %v413
        %v416 = vunpack.c.l.s4 1983009808
        %v417 = vunpack.c.0.s8 %v416
        %v418 = vlaneseq
        %v419 = vshrl.u32 %v418, 7
        %v420 = vsub.s32 %v417, %v419
        %v421 = vrot.slane %v407, %v420
        %v422 = vcombine.high %v414, %v414
        %v423 = vcombine.high %v421, %v421
        %v424 = vcombine.high %v237, %v237
        %v426 = vunpack.c.l.s4 1983009808
        %v427 = vunpack.c.0.s8 %v426
        %v428 = vlaneseq
        %v429 = vshrl.u32 %v428, 7
        %v430 = vsub.s32 %v427, %v429
        %v431 = vrot.slane %v237, %v430
        %v433 = vunpack.c.l.s4 1983009808
        %v434 = vunpack.c.0.s8 %v433
        %v435 = vlaneseq
        %v436 = vshrl.u32 %v435, 7
        %v437 = vsub.s32 %v434, %v436
        %v438 = vrot.slane %v424, %v437
        %v439 = vcombine.high %v431, %v431
        %v440 = vcombine.high %v438, %v438
        %v441 = vcombine.high %v238, %v238
        %v443 = vunpack.c.l.s4 1983009808
        %v444 = vunpack.c.0.s8 %v443
        %v445 = vlaneseq
        %v446 = vshrl.u32 %v445, 7
        %v447 = vsub.s32 %v444, %v446
        %v448 = vrot.slane %v238, %v447
        %v450 = vunpack.c.l.s4 1983009808
        %v451 = vunpack.c.0.s8 %v450
        %v452 = vlaneseq
        %v453 = vshrl.u32 %v452, 7
        %v454 = vsub.s32 %v451, %v453
        %v455 = vrot.slane %v441, %v454
        %v456 = vcombine.high %v448, %v448
        %v457 = vcombine.high %v455, %v455
        %v458 = vcombine.high %v239, %v239
        %v460 = vunpack.c.l.s4 1983009808
        %v461 = vunpack.c.0.s8 %v460
        %v462 = vlaneseq
        %v463 = vshrl.u32 %v462, 7
        %v464 = vsub.s32 %v461, %v463
        %v465 = vrot.slane %v239, %v464
        %v467 = vunpack.c.l.s4 1983009808
        %v468 = vunpack.c.0.s8 %v467
        %v469 = vlaneseq
        %v470 = vshrl.u32 %v469, 7
        %v471 = vsub.s32 %v468, %v470
        %v472 = vrot.slane %v458, %v471
        %v473 = vcombine.high %v465, %v465
        %v489 = vsel %vm302, %v328, %v414
        %v490 = vsel %vm303, %v336, %v422
        %v491 = vsel %vm304, %v335, %v421
        %v492 = vsel %vm305, %v337, %v423
        %v493 = vsel %vm306, %v345, %v431
        %v494 = vsel %vm307, %v353, %v439
        %v495 = vsel %vm308, %v352, %v438
        %v496 = vsel %vm309, %v354, %v440
        %v497 = vsel %vm310, %v362, %v448
        %v498 = vsel %vm311, %v370, %v456
        %v499 = vsel %vm312, %v369, %v455
        %v500 = vsel %vm313, %v371, %v457
        %v501 = vsel %vm314, %v379, %v465
        %v502 = vsel %vm315, %v387, %v473
        %v503 = vsel %vm316, %v386, %v472
        %v504 = vmul.f32 %v489, 1.442695
        %v505 = vpow.pop %v504
        %v506 = vmul.f32 %v490, 1.442695
        %v507 = vpow.pop %v506
        %v508 = vmul.f32 %v491, 1.442695
        %v509 = vpow.pop %v508
        %v510 = vmul.f32 %v492, 1.442695
        %v511 = vpow.pop %v510
        %v512 = vmul.f32 %v493, 1.442695
        %v513 = vpow.pop %v512
        %v514 = vmul.f32 %v494, 1.442695
        %v515 = vpow.pop %v514
        %v516 = vmul.f32 %v495, 1.442695
        %v517 = vpow.pop %v516
        %v518 = vmul.f32 %v496, 1.442695
        %v519 = vpow.pop %v518
        %v520 = vmul.f32 %v497, 1.442695
        %v521 = vpow.pop %v520
        %v522 = vmul.f32 %v498, 1.442695
        %v523 = vpow.pop %v522
        %v524 = vmul.f32 %v499, 1.442695
        %v525 = vpow.pop %v524
        %v526 = vmul.f32 %v500, 1.442695
        %v527 = vpow.pop %v526
        %v528 = vmul.f32 %v501, 1.442695
        %v529 = vpow.pop %v528
        %v530 = vmul.f32 %v502, 1.442695
        %v531 = vpow.pop %v530
        %v532 = vmul.f32 %v503, 1.442695
        %v533 = vpow.pop %v532
        %v534 = vadd.f32 %v505, 1.0
        %v535 = vadd.f32 %v507, 1.0
        %v536 = vadd.f32 %v509, 1.0
        %v537 = vadd.f32 %v511, 1.0
        %v538 = vadd.f32 %v513, 1.0
        %v539 = vadd.f32 %v515, 1.0
        %v540 = vadd.f32 %v517, 1.0
        %v541 = vadd.f32 %v519, 1.0
        %v542 = vadd.f32 %v521, 1.0
        %v543 = vadd.f32 %v523, 1.0
        %v544 = vadd.f32 %v525, 1.0
        %v545 = vadd.f32 %v527, 1.0
        %v546 = vadd.f32 %v529, 1.0
        %v547 = vadd.f32 %v531, 1.0
        %v548 = vadd.f32 %v533, 1.0
        %v549 = vmin.f32 %v534, 3e+38
        %v550 = vmin.f32 %v535, 3e+38
        %v551 = vmin.f32 %v536, 3e+38
        %v552 = vmin.f32 %v537, 3e+38
        %v553 = vmin.f32 %v538, 3e+38
        %v554 = vmin.f32 %v539, 3e+38
        %v555 = vmin.f32 %v540, 3e+38
        %v556 = vmin.f32 %v541, 3e+38
        %v557 = vmin.f32 %v542, 3e+38
        %v558 = vmin.f32 %v543, 3e+38
        %v559 = vmin.f32 %v544, 3e+38
        %v560 = vmin.f32 %v545, 3e+38
        %v561 = vmin.f32 %v546, 3e+38
        %v562 = vmin.f32 %v547, 3e+38
        %v563 = vmin.f32 %v548, 3e+38
        %v564 = vrcp.pop %v549
        %v565 = vrcp.pop %v550
        %v566 = vrcp.pop %v551
        %v567 = vrcp.pop %v552
        %v568 = vrcp.pop %v553
        %v569 = vrcp.pop %v554
        %v570 = vrcp.pop %v555
        %v571 = vrcp.pop %v556
        %v572 = vrcp.pop %v557
        %v573 = vrcp.pop %v558
        %v574 = vrcp.pop %v559
        %v575 = vrcp.pop %v560
        %v576 = vrcp.pop %v561
        %v577 = vrcp.pop %v562
        %v578 = vrcp.pop %v563
        %v579 = vmul.f32 %v549, %v564
        %v580 = vmul.f32 %v550, %v565
        %v581 = vmul.f32 %v551, %v566
        %v582 = vmul.f32 %v552, %v567
        %v583 = vmul.f32 %v553, %v568
        %v584 = vmul.f32 %v554, %v569
        %v585 = vmul.f32 %v555, %v570
        %v586 = vmul.f32 %v556, %v571
        %v587 = vmul.f32 %v557, %v572
        %v588 = vmul.f32 %v558, %v573
        %v589 = vmul.f32 %v559, %v574
        %v590 = vmul.f32 %v560, %v575
        %v591 = vmul.f32 %v561, %v576
        %v592 = vmul.f32 %v562, %v577
        %v593 = vmul.f32 %v563, %v578
        %v594 = vsub.f32 2.0, %v579
        %v595 = vsub.f32 2.0, %v580
        %v596 = vsub.f32 2.0, %v581
        %v597 = vsub.f32 2.0, %v582
        %v598 = vsub.f32 2.0, %v583
        %v599 = vsub.f32 2.0, %v584
        %v600 = vsub.f32 2.0, %v585
        %v601 = vsub.f32 2.0, %v586
        %v602 = vsub.f32 2.0, %v587
        %v603 = vsub.f32 2.0, %v588
        %v604 = vsub.f32 2.0, %v589
        %v605 = vsub.f32 2.0, %v590
        %v606 = vsub.f32 2.0, %v591
        %v607 = vsub.f32 2.0, %v592
        %v608 = vsub.f32 2.0, %v593
        %v609 = vmul.f32 %v564, %v594
        %v610 = vmul.f32 %v565, %v595
        %v611 = vmul.f32 %v566, %v596
        %v612 = vmul.f32 %v567, %v597
        %v613 = vmul.f32 %v568, %v598
        %v614 = vmul.f32 %v569, %v599
        %v615 = vmul.f32 %v570, %v600
        %v616 = vmul.f32 %v571, %v601
        %v617 = vmul.f32 %v572, %v602
        %v618 = vmul.f32 %v573, %v603
        %v619 = vmul.f32 %v574, %v604
        %v620 = vmul.f32 %v575, %v605
        %v621 = vmul.f32 %v576, %v606
        %v622 = vmul.f32 %v577, %v607
        %v623 = vmul.f32 %v578, %v608
        %v624 = vsel %vm302, %v505, %v609
        %v625 = vsel %vm303, %v507, %v610
        %v626 = vsel %vm304, %v509, %v611
        %v627 = vsel %vm305, %v511, %v612
        %v628 = vsel %vm306, %v513, %v613
        %v629 = vsel %vm307, %v515, %v614
        %v630 = vsel %vm308, %v517, %v615
        %v631 = vsel %vm309, %v519, %v616
        %v632 = vsel %vm310, %v521, %v617
        %v633 = vsel %vm311, %v523, %v618
        %v634 = vsel %vm312, %v525, %v619
        %v635 = vsel %vm313, %v527, %v620
        %v636 = vsel %vm314, %v529, %v621
        %v637 = vsel %vm315, %v531, %v622
        %v638 = vsel %vm316, %v533, %v623
        %v641 = vlaneseq
        %v642 = vshrl.u32 %v641, 7
        %v643 = vsub.s32 0, %v642
        %v644 = vrot.slane %v229, %v643
        %v645 = vlaneseq
        %v646 = vshrl.u32 %v645, 7
        %v647 = vsub.s32 1, %v646
        %v648 = vrot.slane %v229, %v647
        %v649 = vlaneseq
        %v650 = vshrl.u32 %v649, 7
        %v651 = vsub.s32 2, %v650
        %v652 = vrot.slane %v229, %v651
        %v653 = vlaneseq
        %v654 = vshrl.u32 %v653, 7
        %v655 = vsub.s32 3, %v654
        %v656 = vrot.slane %v229, %v655
        %v657 = vlaneseq
        %v658 = vshrl.u32 %v657, 7
        %v659 = vsub.s32 4, %v658
        %v660 = vrot.slane %v229, %v659
        %v661 = vlaneseq
        %v662 = vshrl.u32 %v661, 7
        %v663 = vsub.s32 5, %v662
        %v664 = vrot.slane %v229, %v663
        %v665 = vlaneseq
        %v666 = vshrl.u32 %v665, 7
        %v667 = vsub.s32 6, %v666
        %v668 = vrot.slane %v229, %v667
        %v669 = vlaneseq
        %v670 = vshrl.u32 %v669, 7
        %v671 = vsub.s32 7, %v670
        %v672 = vrot.slane %v229, %v671
        %v673 = vlaneseq
        %v674 = vshrl.u32 %v673, 7
        %v675 = vsub.s32 0, %v674
        %v676 = vrot.slane %v231, %v675
        %v677 = vlaneseq
        %v678 = vshrl.u32 %v677, 7
        %v679 = vsub.s32 1, %v678
        %v680 = vrot.slane %v231, %v679
        %v681 = vlaneseq
        %v682 = vshrl.u32 %v681, 7
        %v683 = vsub.s32 2, %v682
        %v684 = vrot.slane %v231, %v683
        %v685 = vlaneseq
        %v686 = vshrl.u32 %v685, 7
        %v687 = vsub.s32 3, %v686
        %v688 = vrot.slane %v231, %v687
        %v689 = vlaneseq
        %v690 = vshrl.u32 %v689, 7
        %v691 = vsub.s32 4, %v690
        %v692 = vrot.slane %v231, %v691
        %v693 = vlaneseq
        %v694 = vshrl.u32 %v693, 7
        %v695 = vsub.s32 5, %v694
        %v696 = vrot.slane %v231, %v695
        %v697 = vlaneseq
        %v698 = vshrl.u32 %v697, 7
        %v699 = vsub.s32 6, %v698
        %v700 = vrot.slane %v231, %v699
        %v716 = vmul.f32 %v624, %v644
        %v717 = vmul.f32 %v625, %v648
        %v718 = vmul.f32 %v626, %v652
        %v719 = vmul.f32 %v627, %v656
        %v720 = vmul.f32 %v628, %v660
        %v721 = vmul.f32 %v629, %v664
        %v722 = vmul.f32 %v630, %v668
        %v723 = vmul.f32 %v631, %v672
        %v724 = vmul.f32 %v632, %v676
        %v725 = vmul.f32 %v633, %v680
        %v726 = vmul.f32 %v634, %v684
        %v727 = vmul.f32 %v635, %v688
        %v728 = vmul.f32 %v636, %v692
        %v729 = vmul.f32 %v637, %v696
        %v730 = vmul.f32 %v638, %v700
        %v733 = vlaneseq
        %v734 = vshrl.u32 %v733, 7
        %v735 = vsub.s32 0, %v734
        %v736 = vrot.slane %v233, %v735
        %v737 = vlaneseq
        %v738 = vshrl.u32 %v737, 7
        %v739 = vsub.s32 1, %v738
        %v740 = vrot.slane %v233, %v739
        %v741 = vlaneseq
        %v742 = vshrl.u32 %v741, 7
        %v743 = vsub.s32 2, %v742
        %v744 = vrot.slane %v233, %v743
        %v745 = vlaneseq
        %v746 = vshrl.u32 %v745, 7
        %v747 = vsub.s32 3, %v746
        %v748 = vrot.slane %v233, %v747
        %v749 = vlaneseq
        %v750 = vshrl.u32 %v749, 7
        %v751 = vsub.s32 4, %v750
        %v752 = vrot.slane %v233, %v751
        %v753 = vlaneseq
        %v754 = vshrl.u32 %v753, 7
        %v755 = vsub.s32 5, %v754
        %v756 = vrot.slane %v233, %v755
        %v757 = vlaneseq
        %v758 = vshrl.u32 %v757, 7
        %v759 = vsub.s32 6, %v758
        %v760 = vrot.slane %v233, %v759
        %v761 = vlaneseq
        %v762 = vshrl.u32 %v761, 7
        %v763 = vsub.s32 7, %v762
        %v764 = vrot.slane %v233, %v763
        %v765 = vlaneseq
        %v766 = vshrl.u32 %v765, 7
        %v767 = vsub.s32 0, %v766
        %v768 = vrot.slane %v235, %v767
        %v769 = vlaneseq
        %v770 = vshrl.u32 %v769, 7
        %v771 = vsub.s32 1, %v770
        %v772 = vrot.slane %v235, %v771
        %v773 = vlaneseq
        %v774 = vshrl.u32 %v773, 7
        %v775 = vsub.s32 2, %v774
        %v776 = vrot.slane %v235, %v775
        %v777 = vlaneseq
        %v778 = vshrl.u32 %v777, 7
        %v779 = vsub.s32 3, %v778
        %v780 = vrot.slane %v235, %v779
        %v781 = vlaneseq
        %v782 = vshrl.u32 %v781, 7
        %v783 = vsub.s32 4, %v782
        %v784 = vrot.slane %v235, %v783
        %v785 = vlaneseq
        %v786 = vshrl.u32 %v785, 7
        %v787 = vsub.s32 5, %v786
        %v788 = vrot.slane %v235, %v787
        %v789 = vlaneseq
        %v790 = vshrl.u32 %v789, 7
        %v791 = vsub.s32 6, %v790
        %v792 = vrot.slane %v235, %v791
        %v808 = vadd.f32 %v716, %v736
        %v809 = vadd.f32 %v717, %v740
        %v810 = vadd.f32 %v718, %v744
        %v811 = vadd.f32 %v719, %v748
        %v812 = vadd.f32 %v720, %v752
        %v813 = vadd.f32 %v721, %v756
        %v814 = vadd.f32 %v722, %v760
        %v815 = vadd.f32 %v723, %v764
        %v816 = vadd.f32 %v724, %v768
        %v817 = vadd.f32 %v725, %v772
        %v818 = vadd.f32 %v726, %v776
        %v819 = vadd.f32 %v727, %v780
        %v820 = vadd.f32 %v728, %v784
        %v821 = vadd.f32 %v729, %v788
        %v822 = vadd.f32 %v730, %v792
        %v838 = vcombine.low %v808, %v809
        %v839 = vcombine.low %v810, %v811
        %v841 = vunpack.c.l.s4 1983009808
        %v842 = vunpack.c.0.s8 %v841
        %v843 = vlaneseq
        %v844 = vshrl.u32 %v843, 7
        %v845 = vsub.s32 %v842, %v844
        %v846 = vrot.slane %v838, %v845
        %v848 = vunpack.c.l.s4 1983009808
        %v849 = vunpack.c.0.s8 %v848
        %v850 = vlaneseq
        %v851 = vshrl.u32 %v850, 7
        %v852 = vsub.s32 %v849, %v851
        %v853 = vrot.slane %v839, %v852
        %v854 = vcombine.low %v846, %v853
        %v855 = vcombine.low %v812, %v813
        %v856 = vcombine.low %v814, %v815
        %v858 = vunpack.c.l.s4 1983009808
        %v859 = vunpack.c.0.s8 %v858
        %v860 = vlaneseq
        %v861 = vshrl.u32 %v860, 7
        %v862 = vsub.s32 %v859, %v861
        %v863 = vrot.slane %v855, %v862
        %v865 = vunpack.c.l.s4 1983009808
        %v866 = vunpack.c.0.s8 %v865
        %v867 = vlaneseq
        %v868 = vshrl.u32 %v867, 7
        %v869 = vsub.s32 %v866, %v868
        %v870 = vrot.slane %v856, %v869
        %v871 = vcombine.low %v863, %v870
        %v872 = vcombine.low %v816, %v817
        %v873 = vcombine.low %v818, %v819
        %v875 = vunpack.c.l.s4 1983009808
        %v876 = vunpack.c.0.s8 %v875
        %v877 = vlaneseq
        %v878 = vshrl.u32 %v877, 7
        %v879 = vsub.s32 %v876, %v878
        %v880 = vrot.slane %v872, %v879
        %v882 = vunpack.c.l.s4 1983009808
        %v883 = vunpack.c.0.s8 %v882
        %v884 = vlaneseq
        %v885 = vshrl.u32 %v884, 7
        %v886 = vsub.s32 %v883, %v885
        %v887 = vrot.slane %v873, %v886
        %v888 = vcombine.low %v880, %v887
        %v889 = vcombine.low %v820, %v821
        %v891 = vunpack.c.l.s4 1983009808
        %v892 = vunpack.c.0.s8 %v891
        %v893 = vlaneseq
        %v894 = vshrl.u32 %v893, 7
        %v895 = vsub.s32 %v892, %v894
        %v896 = vrot.slane %v889, %v895
        %v898 = vunpack.c.l.s4 1983009808
        %v899 = vunpack.c.0.s8 %v898
        %v900 = vlaneseq
        %v901 = vshrl.u32 %v900, 7
        %v902 = vsub.s32 %v899, %v901
        %v903 = vrot.slane %v822, %v902
        %v904 = vcombine.low %v896, %v903
        %909 = vst [vmem:[%s215] sm:$0xff] %v854
        %910 = vst [vmem:[%s215 + $0x8] sm:$0xff] %v871
        %911 = vst [vmem:[%s215 + $0x10] sm:$0xff] %v888
        %912 = vst [vmem:[%s215 + $0x18] sm:$0x3f] %v904
        %s913 = sand.u32 %s98, 1
        %s914 = scalar_lea.sflag [#allocation4], %s913
        %s915 = sand.u32 %s98, 1
        %s916 = smul.addr %s915, 30
        %s917 = scalar_lea.vmem [#allocation7], %s916
        // Predicated region
        $region37: #{tpu_custom_call.1} parent=27 // pred_check
          %p918 = pneg %p108
        $region38: #{tpu_custom_call.1} parent=27 // pred_check_branch
          %920 = sbr.rel (%p918) target = $region40
        $region39: #{tpu_custom_call.1} parent=27 // pred_region
          %s921 = smul.u32 15, %s27
          %s923 = ssub.s32 480, 480
          %924 = vsyncadd %s914, %s923
          %s925 = smul.addr %s26, 30
          %s926 = sadd.s32 %s921, %s925
          %s927 = smul.addr %s926, 32
          %s928 = scalar_lea.hbm %s2, %s927
          %s930 = sshll.u32 %s917, 4
          %s931 = int_to_ptr.vmem [resolvable:$true] %s930
          %933 = dma.vmem_to_hbm [thread:$0]  %s931, 480, %s928, %s914
        $region40: #{tpu_custom_call.1} parent=27 // pred_fallthru
          _
      $region28: #{tpu_custom_call.1} parent=5 // pred_fallthru
        _
      %p934 = scmp.le.s32.totalorder 2, %s17
      // Predicated region
      $region41: #{tpu_custom_call.1} parent=5 // pred_check
        %p935 = pneg %p934
      $region42: #{tpu_custom_call.1} parent=5 // pred_check_branch
        %937 = sbr.rel (%p935) target = $region44
      $region43: #{tpu_custom_call.1} parent=5 // pred_region
        %s938 = ssub.s32 %s17, 2
        // Predicated region
        $region45: #{tpu_custom_call.1} parent=43 // pred_check
          %p939 = pneg %p114
        $region46: #{tpu_custom_call.1} parent=43 // pred_check_branch
          %941 = sbr.rel (%p939) target = $region48
        $region47: #{tpu_custom_call.1} parent=43 // pred_region
          %s942 = sand.u32 %s99, 1
          %s943 = scalar_lea.sflag [#allocation4], %s942
          %s944 = sand.u32 %s99, 1
          %s945 = smul.addr %s944, 30
          %s946 = scalar_lea.vmem [#allocation7], %s945
          %947 = dma.done %s943, 480
        $region48: #{tpu_custom_call.1} parent=43 // pred_fallthru
          _
      $region44: #{tpu_custom_call.1} parent=5 // pred_fallthru
        _
    $region6: #{tpu_custom_call.1} parent=1 // loop_footer
      %s21 = sadd.s32 1, %s17
    $region7: #{tpu_custom_call.1} parent=1 // loop_footer_branch
      %16 = sbr.rel target = $region3
    $region8: #{tpu_custom_call.1} parent=1 // loop_exit
      _
    %948 = vsyncpa [#allocation3], 1
    %s949 = scalar_lea.sflag [#allocation3], 1
    %950 = vsyncpa %s949, 1
    %951 = vsyncpa [#allocation6], 1
    %s952 = scalar_lea.sflag [#allocation6], 1
    %953 = vsyncpa %s952, 1
    %954 = vsyncpa [#allocation4], 1
    %s955 = scalar_lea.sflag [#allocation4], 1
    %956 = vsyncpa %s955, 1

</llo_original>
